<compile_context>
chip_gen: v6e
topology: v6e:2x2x1
jax: 0.10.0
libtpu: 0.0.40
codegen_flags: <defaults>
</compile_context>

<pallas_src>
import functools

import jax
import jax.numpy as jnp
from jax import lax
from jax.experimental import pallas as pl
from jax.experimental.pallas import tpu as pltpu


# ------------------------------ tuning knobs --------------------------------

# Per-grid-step resident-set budget used to pick row tiles. Kept well under
# the 16 MiB v5e scoped-VMEM default (and far under v7x's 64 MiB physical
# VMEM with double-buffering), so the same tile picker is safe on v5e/v6e/v7x.
_VMEM_BUDGET = 12 * 1024 * 1024
# Scoped-VMEM limit requested from Mosaic (>= v5e's 16 MiB default, == the
# v6e/v7x default, well under every generation's physical VMEM).
_VMEM_LIMIT = 32 * 1024 * 1024

# TODO(synk): set to jnp.bfloat16 on v6e / v7x for MXU-native matmuls (halves
# operand DMA bytes and avoids the multi-pass f32 MXU path); requires
# relaxing the numerical tolerances in the test harness below.
_MXU_DTYPE = None


def _mxu(x):
    return x if _MXU_DTYPE is None else x.astype(_MXU_DTYPE)


def _cp(dim_semantics):
    return pltpu.CompilerParams(
        dimension_semantics=dim_semantics, vmem_limit_bytes=_VMEM_LIMIT
    )


def _pick_row_tile(n_rows, per_row_bytes, fixed_bytes=0, max_rows=1024):
    """Largest row tile (full rows, else a multiple-of-8 power of two) whose
    double-buffered footprint fits the VMEM budget."""
    budget = max(_VMEM_BUDGET - fixed_bytes, 1 << 20)
    fits = lambda r: 2 * r * per_row_bytes <= budget
    if n_rows <= max_rows and fits(n_rows):
        return n_rows
    tm = max_rows
    while tm > 8 and (tm >= n_rows or not fits(tm)):
        tm //= 2
    return tm


# ------------------------------- Pallas kernels -----------------------------


def _matmul_kernel(x_ref, w_ref, o_ref):
    # x: (tm, K), w: (K, N) -> o: (tm, N)   (bias-free)
    o_ref[...] = jnp.dot(
        _mxu(x_ref[...]), _mxu(w_ref[...]), preferred_element_type=jnp.float32
    ).astype(o_ref.dtype)


def _matmul_bias_kernel(x_ref, w_ref, b_ref, o_ref):
    # x: (tm, K), w: (K, N), b: (1, N) -> o: (tm, N)
    acc = jnp.dot(
        _mxu(x_ref[...]), _mxu(w_ref[...]), preferred_element_type=jnp.float32
    )
    o_ref[...] = (acc + b_ref[...]).astype(o_ref.dtype)


def _qkv_proj_kernel(x_ref, qw_ref, kvw_ref, oq_ref, okv_ref):
    # Fused q + kv projection: the x tile is read from HBM once, two outputs.
    x = _mxu(x_ref[...])
    oq_ref[...] = jnp.dot(
        x, _mxu(qw_ref[...]), preferred_element_type=jnp.float32
    ).astype(oq_ref.dtype)
    okv_ref[...] = jnp.dot(
        x, _mxu(kvw_ref[...]), preferred_element_type=jnp.float32
    ).astype(okv_ref.dtype)


def _ln_matmul_kernel(x_ref, g_ref, b_ref, w_ref, o_ref):
    # LayerNorm (eps=1e-5, torch default) fused into the kv matmul prologue.
    # x: (tm, C), g/b: (1, C), w: (C, N) -> o: (tm, N)
    x = x_ref[...].astype(jnp.float32)
    mu = jnp.mean(x, axis=-1, keepdims=True)
    var = jnp.mean((x - mu) ** 2, axis=-1, keepdims=True)
    y = (x - mu) * lax.rsqrt(var + 1e-5) * g_ref[...] + b_ref[...]
    o_ref[...] = jnp.dot(
        _mxu(y), _mxu(w_ref[...]), preferred_element_type=jnp.float32
    ).astype(o_ref.dtype)


def _attn_proj_kernel(q_ref, kv_ref, pw_ref, pb_ref, o_ref, *rest,
                      num_heads, head_dim, scale, with_attn):
    # One (batch, query-tile) per grid step, all heads handled inside via
    # column slices of the packed q / kv slabs (no HBM head transposes).
    # q: (tq, C), kv: (M, 2C), pw: (C, C), pb: (1, C)
    # outputs: o: (tq, C) [= attn_out @ proj_w + proj_b], optional p: (nh, tq, M)
    # scratch: acc: (tq, C) f32 accumulator, stored per head, read once.
    if with_attn:
        p_ref, acc_ref = rest
    else:
        (acc_ref,) = rest
    C = num_heads * head_dim
    q = q_ref[...] * scale              # fold the softmax scale into q once
    kv = kv_ref[...]
    for h in range(num_heads):
        lo = h * head_dim
        qh = q[:, lo:lo + head_dim]                  # (tq, hd)
        kh = kv[:, lo:lo + head_dim]                 # (M, hd)
        vh = kv[:, C + lo:C + lo + head_dim]         # (M, hd)
        # contract the last dims directly -- no materialized k transpose
        s = lax.dot_general(
            _mxu(qh), _mxu(kh), (((1,), (1,)), ((), ())),
            preferred_element_type=jnp.float32,
        )                                            # (tq, M) f32
        s = s - jnp.max(s, axis=-1, keepdims=True)
        e = jnp.exp(s)
        # EUP approximate reciprocal: separate VLIW slot, essentially free.
        p = e * pl.reciprocal(jnp.sum(e, axis=-1, keepdims=True), approx=True)
        if with_attn:
            # TODO(synk): at production shapes, store this in bf16 and pad M
            # up to a multiple of 128 so this becomes an unmasked lane-dense vst.
            p_ref[h, :, :] = p.astype(p_ref.dtype)
        acc_ref[:, lo:lo + head_dim] = jnp.dot(
            _mxu(p.astype(vh.dtype)), _mxu(vh), preferred_element_type=jnp.float32
        )
    # Fused output projection epilogue: saves a full (B, N, C) HBM round trip.
    out = jnp.dot(
        _mxu(acc_ref[...]), _mxu(pw_ref[...]), preferred_element_type=jnp.float32
    ) + pb_ref[...]
    o_ref[...] = out.astype(o_ref.dtype)             # single lane-dense store


# ------------------------------ Pallas wrappers -----------------------------


def pallas_linear(x2d, w, b=None, *, max_rows=1024):
    """y = x2d @ w (+ b)   (x2d: (M, K), w: (K, N), b: (N,) or None)."""
    M, K = x2d.shape
    Kw, N = w.shape
    assert K == Kw
    item = x2d.dtype.itemsize
    per_row = (K + N) * item
    fixed = 2 * (K * N + N) * item          # double-buffered weight + bias
    tm = _pick_row_tile(M, per_row, fixed, max_rows=max_rows)
    grid = (pl.cdiv(M, tm),)
    # TODO(synk): weight/bias blocks are grid-invariant; pipeline_mode=
    # pl.Buffered(1) would reclaim their second pipeline buffer.
    x_spec = pl.BlockSpec((tm, K), lambda i: (i, 0))
    w_spec = pl.BlockSpec((K, N), lambda i: (0, 0))
    o_spec = pl.BlockSpec((tm, N), lambda i: (i, 0))
    out_shape = jax.ShapeDtypeStruct((M, N), x2d.dtype)
    cp = _cp(("parallel",))
    if b is None:
        return pl.pallas_call(
            _matmul_kernel, out_shape=out_shape, grid=grid,
            in_specs=[x_spec, w_spec], out_specs=o_spec, compiler_params=cp,
        )(x2d, w)
    b_spec = pl.BlockSpec((1, N), lambda i: (0, 0))
    return pl.pallas_call(
        _matmul_bias_kernel, out_shape=out_shape, grid=grid,
        in_specs=[x_spec, w_spec, b_spec], out_specs=o_spec, compiler_params=cp,
    )(x2d, w, b.reshape(1, N))


def pallas_qkv_proj(x2d, q_w, kv_w, *, max_rows=1024):
    """Fused q/kv projections sharing one read of x2d. Returns (q, kv)."""
    M, C = x2d.shape
    Nq, Nkv = q_w.shape[1], kv_w.shape[1]
    item = x2d.dtype.itemsize
    per_row = (C + Nq + Nkv) * item
    fixed = 2 * (C * Nq + C * Nkv) * item
    tm = _pick_row_tile(M, per_row, fixed, max_rows=max_rows)
    grid = (pl.cdiv(M, tm),)
    return pl.pallas_call(
        _qkv_proj_kernel,
        out_shape=(jax.ShapeDtypeStruct((M, Nq), x2d.dtype),
                   jax.ShapeDtypeStruct((M, Nkv), x2d.dtype)),
        grid=grid,
        in_specs=[
            pl.BlockSpec((tm, C), lambda i: (i, 0)),
            pl.BlockSpec((C, Nq), lambda i: (0, 0)),
            pl.BlockSpec((C, Nkv), lambda i: (0, 0)),
        ],
        out_specs=(pl.BlockSpec((tm, Nq), lambda i: (i, 0)),
                   pl.BlockSpec((tm, Nkv), lambda i: (i, 0))),
        compiler_params=_cp(("parallel",)),
    )(x2d, q_w, kv_w)


def pallas_ln_linear(x2d, gamma, beta, w, *, max_rows=1024):
    """y = LayerNorm(x2d) @ w   (LN fused into the matmul prologue)."""
    M, C = x2d.shape
    _, N = w.shape
    item = x2d.dtype.itemsize
    per_row = (C + N) * item
    fixed = 2 * (C * N + 2 * C) * item
    tm = _pick_row_tile(M, per_row, fixed, max_rows=max_rows)
    grid = (pl.cdiv(M, tm),)
    return pl.pallas_call(
        _ln_matmul_kernel,
        out_shape=jax.ShapeDtypeStruct((M, N), x2d.dtype),
        grid=grid,
        in_specs=[
            pl.BlockSpec((tm, C), lambda i: (i, 0)),
            pl.BlockSpec((1, C), lambda i: (0, 0)),
            pl.BlockSpec((1, C), lambda i: (0, 0)),
            pl.BlockSpec((C, N), lambda i: (0, 0)),
        ],
        out_specs=pl.BlockSpec((tm, N), lambda i: (i, 0)),
        compiler_params=_cp(("parallel",)),
    )(x2d, gamma.reshape(1, C), beta.reshape(1, C), w)


def pallas_attention_proj(q_lin, kv_lin, proj_w, proj_b, *, num_heads, scale,
                          return_attn=True, max_block_q=512):
    """Attention (all heads) + fused output projection.

    q_lin: (B, N, C), kv_lin: (B, M, 2C) straight out of the projections.
    Returns (out (B, N, C), attn (B, nh, N, M) or None).
    """
    B, N, C = q_lin.shape
    M = kv_lin.shape[1]
    hd = C // num_heads
    item = 4  # f32 intermediates
    per_row = (2 * C + C + (num_heads * M if return_attn else 0)) * item
    fixed = (2 * (M * 2 * C) + C * C + C) * item
    tq = _pick_row_tile(N, per_row, fixed, max_rows=max_block_q)

    kernel = functools.partial(
        _attn_proj_kernel, num_heads=num_heads, head_dim=hd, scale=scale,
        with_attn=return_attn,
    )
    in_specs = [
        pl.BlockSpec((None, tq, C), lambda b, i: (b, i, 0)),
        pl.BlockSpec((None, M, 2 * C), lambda b, i: (b, 0, 0)),
        pl.BlockSpec((C, C), lambda b, i: (0, 0)),
        pl.BlockSpec((1, C), lambda b, i: (0, 0)),
    ]
    o_shape = jax.ShapeDtypeStruct((B, N, C), q_lin.dtype)
    o_spec = pl.BlockSpec((None, tq, C), lambda b, i: (b, i, 0))
    if return_attn:
        out_shape = (o_shape,
                     jax.ShapeDtypeStruct((B, num_heads, N, M), q_lin.dtype))
        out_specs = (o_spec,
                     pl.BlockSpec((None, num_heads, tq, M),
                                  lambda b, i: (b, 0, i, 0)))
    else:
        out_shape = o_shape
        out_specs = o_spec

    res = pl.pallas_call(
        kernel,
        out_shape=out_shape,
        grid=(B, pl.cdiv(N, tq)),
        in_specs=in_specs,
        out_specs=out_specs,
        scratch_shapes=[pltpu.VMEM((tq, C), jnp.float32)],
        compiler_params=_cp(("parallel", "parallel")),
    )(q_lin, kv_lin, proj_w, proj_b.reshape(1, C))
    if return_attn:
        out, attn = res
        return out, attn
    return res, None


# ------------------------------- Module forward -----------------------------


def attention_forward(x, H, W, params, *, num_heads, sr_ratio, locals_flag,
                      return_attn=True):
    """Mirrors Attention.forward(x, H, W). Returns (x_out, attn_prob)."""
    B, N, C = x.shape
    hd = C // num_heads
    scale = hd ** (-0.5)

    if sr_ratio > 1:
        # q = self.q(x)   (qkv_bias=False -> no bias)
        q_lin = pallas_linear(x.reshape(B * N, C), params["q_w"]).reshape(B, N, C)
        s = sr_ratio
        if locals_flag:
            head_tok = x[:, :1, :]          # (B, 1, C) class token
            x_sp = x[:, 1:, :]              # (B, H*W, C)
        else:
            x_sp = x
        Hs, Ws = H // s, W // s
        # NCHW conv with kernel=stride=s  ==  non-overlapping patch matmul.
        # TODO(synk): fold this im2col transpose into the sr matmul's index_map
        # to avoid the materialized HBM copy of x_sp.
        patches = (
            x_sp.reshape(B, Hs, s, Ws, s, C)
            .transpose(0, 1, 3, 5, 2, 4)          # (B, Hs, Ws, C, s, s)
            .reshape(B * Hs * Ws, C * s * s)      # flattened as (ci, ki, kj)
        )
        sr_out = pallas_linear(patches, params["sr_w"], params["sr_b"])
        sr_out = sr_out.reshape(B, Hs * Ws, C)
        x_ = jnp.concatenate([head_tok, sr_out], axis=1) if locals_flag else sr_out
        M = x_.shape[1]
        # LayerNorm fused into the kv projection prologue (handles the class
        # token uniformly, no standalone layernorm kernel / HBM round trip).
        kv_lin = pallas_ln_linear(
            x_.reshape(B * M, C), params["ln_g"], params["ln_b"], params["kv_w"]
        ).reshape(B, M, 2 * C)
    else:
        # Fused q + kv projection: x is read from HBM once.
        q2d, kv2d = pallas_qkv_proj(x.reshape(B * N, C), params["q_w"], params["kv_w"])
        q_lin = q2d.reshape(B, N, C)
        kv_lin = kv2d.reshape(B, N, 2 * C)

    # attn_drop(p=0) == identity; proj_drop(p=0) == identity.
    # Output projection is fused into the attention kernel epilogue.
    out, attn_prob = pallas_attention_proj(
        q_lin, kv_lin, params["proj_w"], params["proj_b"],
        num_heads=num_heads, scale=scale, return_attn=return_attn,
    )
    return out, attn_prob


# ------------------------------ pure-JAX reference --------------------------


def attention_reference(x, H, W, params, *, num_heads, sr_ratio, locals_flag):
    B, N, C = x.shape
    hd = C // num_heads
    scale = hd ** (-0.5)
    q = (x @ params["q_w"]).reshape(B, N, num_heads, hd).transpose(0, 2, 1, 3)
    if sr_ratio > 1:
        s = sr_ratio
        x_sp = x[:, 1:, :] if locals_flag else x
        Hs, Ws = H // s, W // s
        patches = (
            x_sp.reshape(B, Hs, s, Ws, s, C)
            .transpose(0, 1, 3, 5, 2, 4)
            .reshape(B, Hs * Ws, C * s * s)
        )
        sr_out = patches @ params["sr_w"] + params["sr_b"]
        x_ = jnp.concatenate([x[:, :1, :], sr_out], axis=1) if locals_flag else sr_out
        mu = jnp.mean(x_, -1, keepdims=True)
        var = jnp.mean((x_ - mu) ** 2, -1, keepdims=True)
        x_ = (x_ - mu) * jax.lax.rsqrt(var + 1e-5) * params["ln_g"] + params["ln_b"]
        kv_in = x_
    else:
        kv_in = x
    M = kv_in.shape[1]
    kv = (kv_in @ params["kv_w"]).reshape(B, M, 2, num_heads, hd).transpose(2, 0, 3, 1, 4)
    k, v = kv[0], kv[1]
    s_ = jnp.einsum("bhnd,bhmd->bhnm", q, k) * scale
    p = jax.nn.softmax(s_, axis=-1)
    out = jnp.einsum("bhnm,bhmd->bhnd", p, v).transpose(0, 2, 1, 3).reshape(B, N, C)
    return out @ params["proj_w"] + params["proj_b"], p


# ------------------------------------ main -----------------------------------


if __name__ == "__main__":
    B, H, W, C = 2, 8, 8, 32
    num_heads = 4

    key = jax.random.PRNGKey(0)
    ks = jax.random.split(key, 8)
    init = lambda k, shp: (0.02 * jax.random.normal(k, shp, jnp.float32))
    sr_for_params = 2
    params = {
        "q_w": init(ks[0], (C, C)),                 # nn.Linear(dim, dim, bias=False)
        "kv_w": init(ks[1], (C, 2 * C)),            # nn.Linear(dim, 2*dim, bias=False)
        "proj_w": init(ks[2], (C, C)),              # nn.Linear(dim, dim)
        "proj_b": init(ks[3], (C,)),
        "sr_w": init(ks[4], (C * sr_for_params * sr_for_params, C)),  # Conv2d(C,C,k=s,stride=s)
        "sr_b": init(ks[5], (C,)),
        "ln_g": jnp.ones((C,), jnp.float32),        # nn.LayerNorm(dim)
        "ln_b": jnp.zeros((C,), jnp.float32),
    }

    configs = [
        dict(sr_ratio=2, locals_flag=1),   # sr + class-token path
        dict(sr_ratio=2, locals_flag=0),   # sr path, no class token
        dict(sr_ratio=1, locals_flag=0),   # plain attention path (fused q+kv)
    ]
    for cfg in configs:
        sr_ratio, locals_flag = cfg["sr_ratio"], cfg["locals_flag"]
        N = H * W + (1 if locals_flag else 0)
        x = jax.random.normal(ks[6], (B, N, C), jnp.float32)

        out, attn = attention_forward(
            x, H, W, params, num_heads=num_heads,
            sr_ratio=sr_ratio, locals_flag=locals_flag,
        )
        jax.block_until_ready((out, attn))

        ref_out, ref_attn = attention_reference(
            x, H, W, params, num_heads=num_heads,
            sr_ratio=sr_ratio, locals_flag=locals_flag,
        )
        if sr_ratio > 1:
            M = (1 if locals_flag else 0) + (H // sr_ratio) * (W // sr_ratio)
        else:
            M = N
        assert out.shape == (B, N, C) and attn.shape == (B, num_heads, N, M)
        # Tolerances relaxed (vs 2e-4) for the approx-reciprocal softmax.
        assert jnp.allclose(out, ref_out, atol=3e-3, rtol=3e-3), \
            f"out mismatch {cfg}: {float(jnp.max(jnp.abs(out - ref_out)))}"
        assert jnp.allclose(attn, ref_attn, atol=3e-3, rtol=3e-3), \
            f"attn mismatch {cfg}: {float(jnp.max(jnp.abs(attn - ref_attn)))}"

    # attn-prob writeback (the dominant HBM traffic) is skipped entirely when
    # the caller does not consume it.
    out_no_attn, none_attn = attention_forward(
        x, H, W, params, num_heads=num_heads,
        sr_ratio=1, locals_flag=0, return_attn=False,
    )
    jax.block_until_ready(out_no_attn)
    assert none_attn is None
    assert jnp.allclose(out_no_attn, ref_out, atol=3e-3, rtol=3e-3)

    print("KERNEL_OK")
</pallas_src>

<mosaic_0001>
module attributes {stable_mosaic.version = 11 : i64} {
  func.func @_matmul_kernel(%arg0: i32, %arg1: memref<130x32xf32, #tpu.memory_space<vmem>>, %arg2: memref<32x32xf32, #tpu.memory_space<vmem>>, %arg3: memref<130x32xf32, #tpu.memory_space<vmem>>) attributes {dimension_semantics = [#tpu.dimension_semantics<parallel>], iteration_bounds = array<i64: 1>, scalar_prefetch = 0 : i64, scratch_operands = 0 : i64, tpu.core_type = #tpu.core_type<tc>, window_params = [{transform_indices = @transform_0, window_bounds = array<i64: 130, 32>}, {pipeline_mode = #tpu.pipeline_mode<synchronous>, transform_indices = @transform_1, window_bounds = array<i64: 32, 32>}, {transform_indices = @transform_2, window_bounds = array<i64: 130, 32>}]} {
    %c0 = arith.constant 0 : index
    %c0_0 = arith.constant 0 : index
    %0 = vector.load %arg1[%c0, %c0_0] : memref<130x32xf32, #tpu.memory_space<vmem>>, vector<130x32xf32>
    %c0_1 = arith.constant 0 : index
    %c0_2 = arith.constant 0 : index
    %1 = vector.load %arg2[%c0_1, %c0_2] : memref<32x32xf32, #tpu.memory_space<vmem>>, vector<32x32xf32>
    %cst = arith.constant dense<0.000000e+00> : vector<130x32xf32>
    %2 = tpu.matmul %0, %1, %cst {dimension_numbers = #tpu.dot_dimension_numbers<[1], [0], [0], [1], [0, 0, 1, 1], [], []>} : vector<130x32xf32>, vector<32x32xf32>, vector<130x32xf32> -> vector<130x32xf32>
    %c0_3 = arith.constant 0 : index
    %c0_4 = arith.constant 0 : index
    %3 = vector.load %arg3[%c0_3, %c0_4] : memref<130x32xf32, #tpu.memory_space<vmem>>, vector<130x32xf32>
    tpu.vector_store %arg3[%c0_3, %c0_4], %2 {strides = array<i32>} : memref<130x32xf32, #tpu.memory_space<vmem>>, vector<130x32xf32>,
    return
  }
  func.func @transform_0(%arg0: i32) -> (i32, i32) {
    %c0_i32 = arith.constant 0 : i32
    %c0_i32_0 = arith.constant 0 : i32
    return %arg0, %c0_i32 : i32, i32
  }
  func.func @transform_1(%arg0: i32) -> (i32, i32) {
    %c0_i32 = arith.constant 0 : i32
    %c0_i32_0 = arith.constant 0 : i32
    %c0_i32_1 = arith.constant 0 : i32
    return %c0_i32, %c0_i32_0 : i32, i32
  }
  func.func @transform_2(%arg0: i32) -> (i32, i32) {
    %c0_i32 = arith.constant 0 : i32
    %c0_i32_0 = arith.constant 0 : i32
    return %arg0, %c0_i32 : i32, i32
  }
}

</mosaic_0001>

<llo_original>
// kernel: tpu_custom_call.1
$region0: #{tpu_custom_call.1}
  #allocation0 [shape = 'u32[]', space=smem, size = 0x4, offset = 0x4, fixed_abs, tag = 'smem constant byte address 0x4 - core index']
  #allocation1 [shape = 'u32[144,128]{1,0:T(1,128)}', space=vmem, size = 0x12000, scoped, tag = 'internal scratch']
  %s0 = inlined_call_operand.vmem [shape: f32[130,32], index: 0, kind: input, shape index: {}]
  %s1 = inlined_call_operand.vmem [shape: f32[32,32], index: 1, kind: input, shape index: {}]
  %s2 = inlined_call_operand.vmem [shape: f32[130,32], index: 2, kind: output, shape index: {}]
  %s3 = sld [smem:[#allocation0]]
  $region18: #{tpu_custom_call.1} parent=0
    _
  %s5 = ssub.s32 1, %s3
  %s6 = scalar_select 0, %s5, %s3
  // Predicated region
  $region2: #{tpu_custom_call.1} parent=0 // pred_check
    _
  $region3: #{tpu_custom_call.1} parent=0 // pred_check_branch
    %8 = sbr.rel (0) target = $region5
  $region4: #{tpu_custom_call.1} parent=0 // pred_region
    _
  $region5: #{tpu_custom_call.1} parent=0 // pred_fallthru
    _
  // Predicated region
  $region6: #{tpu_custom_call.1} parent=0 // pred_check
    _
  $region7: #{tpu_custom_call.1} parent=0 // pred_check_branch
    %10 = sbr.rel (0) target = $region9
  $region8: #{tpu_custom_call.1} parent=0 // pred_region
    _
  $region9: #{tpu_custom_call.1} parent=0 // pred_fallthru
    _
  %v11 = vld [vmem:[%s0] sm:$0xff]
  %v12 = vld [vmem:[%s0 + $0x8] sm:$0xff]
  %v13 = vld [vmem:[%s0 + $0x10] sm:$0xff]
  %v14 = vld [vmem:[%s0 + $0x18] sm:$0xff]
  %v15 = vld [vmem:[%s0 + $0x20] sm:$0xff]
  %v16 = vld [vmem:[%s0 + $0x28] sm:$0xff]
  %v17 = vld [vmem:[%s0 + $0x30] sm:$0xff]
  %v18 = vld [vmem:[%s0 + $0x38] sm:$0xff]
  %v19 = vld [vmem:[%s0 + $0x40] sm:$0xff]
  %v20 = vld [vmem:[%s0 + $0x48] sm:$0xff]
  %v21 = vld [vmem:[%s0 + $0x50] sm:$0xff]
  %v22 = vld [vmem:[%s0 + $0x58] sm:$0xff]
  %v23 = vld [vmem:[%s0 + $0x60] sm:$0xff]
  %v24 = vld [vmem:[%s0 + $0x68] sm:$0xff]
  %v25 = vld [vmem:[%s0 + $0x70] sm:$0xff]
  %v26 = vld [vmem:[%s0 + $0x78] sm:$0xff]
  %v27 = vld [vmem:[%s0 + $0x80] sm:$0x3]
  %v28 = vld [vmem:[%s1] sm:$0xff]
  %v29 = vld [vmem:[%s1 + $0x8] sm:$0xff]
  %v30 = vld [vmem:[%s1 + $0x10] sm:$0xff]
  %v31 = vld [vmem:[%s1 + $0x18] sm:$0xff]
  %vm32 = vcmask 261120
  %v34 = vsel %vm32, %v11, 0
  %v37 = vsel %vm32, %v12, 0
  %v40 = vsel %vm32, %v13, 0
  %v43 = vsel %vm32, %v14, 0
  %v46 = vsel %vm32, %v15, 0
  %v49 = vsel %vm32, %v16, 0
  %v52 = vsel %vm32, %v17, 0
  %v55 = vsel %vm32, %v18, 0
  %v58 = vsel %vm32, %v19, 0
  %v61 = vsel %vm32, %v20, 0
  %v64 = vsel %vm32, %v21, 0
  %v67 = vsel %vm32, %v22, 0
  %v70 = vsel %vm32, %v23, 0
  %v73 = vsel %vm32, %v24, 0
  %v76 = vsel %vm32, %v25, 0
  %v79 = vsel %vm32, %v26, 0
  %v82 = vsel %vm32, %v27, 0
  %84 = vmatprep.subr.mxu0 0.0
  %85 = vmatpush1.msra.mxu0 0.0
  %86 = vmatprep.subr.mxu0 0.0
  %87 = vmatpush1.msra.mxu0 0.0
  %88 = vmatprep.subr.mxu0 0.0
  %89 = vmatpush1.msra.mxu0 0.0
  %90 = vmatprep.subr.mxu0 0.0
  %91 = vmatpush1.msra.mxu0 0.0
  %92 = vmatprep.subr.mxu0 0.0
  %93 = vmatpush1.msra.mxu0 0.0
  %94 = vmatprep.subr.mxu0 0.0
  %95 = vmatpush1.msra.mxu0 0.0
  %96 = vmatprep.subr.mxu0 0.0
  %97 = vmatpush1.msra.mxu0 0.0
  %98 = vmatprep.subr.mxu0 0.0
  %99 = vmatpush1.msra.mxu0 0.0
  %100 = vmatprep.subr.mxu0 0.0
  %101 = vmatpush1.msra.mxu0 0.0
  %102 = vmatprep.subr.mxu0 0.0
  %103 = vmatpush1.msra.mxu0 0.0
  %104 = vmatprep.subr.mxu0 0.0
  %105 = vmatpush1.msra.mxu0 0.0
  %106 = vmatprep.subr.mxu0 0.0
  %107 = vmatpush1.msra.mxu0 0.0
  %108 = vmatprep.subr.mxu0 0.0
  %109 = vmatpush1.msra.mxu0 %v31
  %110 = vmatprep.subr.mxu0 0.0
  %111 = vmatpush1.msra.mxu0 %v30
  %112 = vmatprep.subr.mxu0 0.0
  %113 = vmatpush1.msra.mxu0 %v29
  %114 = vmatprep.subr.mxu0 0.0
  %115 = vmatpush1.msra.mxu0 %v28
  %116 = vmatprep.subr.mxu0 0.0
  %117 = vmatpush2.msra.mxu0 0.0
  %118 = vmatprep.subr.mxu0 0.0
  %119 = vmatpush2.msra.mxu0 0.0
  %120 = vmatprep.subr.mxu0 0.0
  %121 = vmatpush2.msra.mxu0 0.0
  %122 = vmatprep.subr.mxu0 0.0
  %123 = vmatpush2.msra.mxu0 0.0
  %124 = vmatprep.subr.mxu0 0.0
  %125 = vmatpush2.msra.mxu0 0.0
  %126 = vmatprep.subr.mxu0 0.0
  %127 = vmatpush2.msra.mxu0 0.0
  %128 = vmatprep.subr.mxu0 0.0
  %129 = vmatpush2.msra.mxu0 0.0
  %130 = vmatprep.subr.mxu0 0.0
  %131 = vmatpush2.msra.mxu0 0.0
  %132 = vmatprep.subr.mxu0 0.0
  %133 = vmatpush2.msra.mxu0 0.0
  %134 = vmatprep.subr.mxu0 0.0
  %135 = vmatpush2.msra.mxu0 0.0
  %136 = vmatprep.subr.mxu0 0.0
  %137 = vmatpush2.msra.mxu0 0.0
  %138 = vmatprep.subr.mxu0 0.0
  %139 = vmatpush2.msra.mxu0 0.0
  %140 = vmatprep.subr.mxu0 0.0
  %141 = vmatpush2.msra.mxu0 0.0
  %142 = vmatprep.subr.mxu0 0.0
  %143 = vmatpush2.msra.mxu0 0.0
  %144 = vmatprep.subr.mxu0 0.0
  %145 = vmatpush2.msra.mxu0 0.0
  %146 = vmatprep.subr.mxu0 0.0
  %147 = vmatpush2.msra.mxu0 0.0
  %148 = vmatprep.mubr.f32.mxu0 0.0
  %149 = vmatmul.mubr.f32.gmra.mxu0 %v34
  %v150 = vpop.f32.mrf.mxu0
  %v151 = vadd.f32 0.0, %v150
  %v152 = vpop.f32.mrf.mxu0
  %153 = vmatprep.mubr.f32.mxu0 0.0
  %154 = vmatmul.mubr.f32.gmra.mxu0 %v37
  %v155 = vpop.f32.mrf.mxu0
  %v156 = vadd.f32 0.0, %v155
  %v157 = vpop.f32.mrf.mxu0
  %158 = vmatprep.mubr.f32.mxu0 0.0
  %159 = vmatmul.mubr.f32.gmra.mxu0 %v40
  %v160 = vpop.f32.mrf.mxu0
  %v161 = vadd.f32 0.0, %v160
  %v162 = vpop.f32.mrf.mxu0
  %163 = vmatprep.mubr.f32.mxu0 0.0
  %164 = vmatmul.mubr.f32.gmra.mxu0 %v43
  %v165 = vpop.f32.mrf.mxu0
  %v166 = vadd.f32 0.0, %v165
  %v167 = vpop.f32.mrf.mxu0
  %168 = vmatprep.mubr.f32.mxu0 0.0
  %169 = vmatmul.mubr.f32.gmra.mxu0 %v46
  %v170 = vpop.f32.mrf.mxu0
  %v171 = vadd.f32 0.0, %v170
  %v172 = vpop.f32.mrf.mxu0
  %173 = vmatprep.mubr.f32.mxu0 0.0
  %174 = vmatmul.mubr.f32.gmra.mxu0 %v49
  %v175 = vpop.f32.mrf.mxu0
  %v176 = vadd.f32 0.0, %v175
  %v177 = vpop.f32.mrf.mxu0
  %178 = vmatprep.mubr.f32.mxu0 0.0
  %179 = vmatmul.mubr.f32.gmra.mxu0 %v52
  %v180 = vpop.f32.mrf.mxu0
  %v181 = vadd.f32 0.0, %v180
  %v182 = vpop.f32.mrf.mxu0
  %183 = vmatprep.mubr.f32.mxu0 0.0
  %184 = vmatmul.mubr.f32.gmra.mxu0 %v55
  %v185 = vpop.f32.mrf.mxu0
  %v186 = vadd.f32 0.0, %v185
  %v187 = vpop.f32.mrf.mxu0
  %188 = vmatprep.mubr.f32.mxu0 0.0
  %189 = vmatmul.mubr.f32.gmra.mxu0 %v58
  %v190 = vpop.f32.mrf.mxu0
  %v191 = vadd.f32 0.0, %v190
  %v192 = vpop.f32.mrf.mxu0
  %193 = vmatprep.mubr.f32.mxu0 0.0
  %194 = vmatmul.mubr.f32.gmra.mxu0 %v61
  %v195 = vpop.f32.mrf.mxu0
  %v196 = vadd.f32 0.0, %v195
  %v197 = vpop.f32.mrf.mxu0
  %198 = vmatprep.mubr.f32.mxu0 0.0
  %199 = vmatmul.mubr.f32.gmra.mxu0 %v64
  %v200 = vpop.f32.mrf.mxu0
  %v201 = vadd.f32 0.0, %v200
  %v202 = vpop.f32.mrf.mxu0
  %203 = vmatprep.mubr.f32.mxu0 0.0
  %204 = vmatmul.mubr.f32.gmra.mxu0 %v67
  %v205 = vpop.f32.mrf.mxu0
  %v206 = vadd.f32 0.0, %v205
  %v207 = vpop.f32.mrf.mxu0
  %208 = vmatprep.mubr.f32.mxu0 0.0
  %209 = vmatmul.mubr.f32.gmra.mxu0 %v70
  %v210 = vpop.f32.mrf.mxu0
  %v211 = vadd.f32 0.0, %v210
  %v212 = vpop.f32.mrf.mxu0
  %213 = vmatprep.mubr.f32.mxu0 0.0
  %214 = vmatmul.mubr.f32.gmra.mxu0 %v73
  %v215 = vpop.f32.mrf.mxu0
  %v216 = vadd.f32 0.0, %v215
  %v217 = vpop.f32.mrf.mxu0
  %218 = vmatprep.mubr.f32.mxu0 0.0
  %219 = vmatmul.mubr.f32.gmra.mxu0 %v76
  %v220 = vpop.f32.mrf.mxu0
  %v221 = vadd.f32 0.0, %v220
  %v222 = vpop.f32.mrf.mxu0
  %223 = vmatprep.mubr.f32.mxu0 0.0
  %224 = vmatmul.mubr.f32.gmra.mxu0 %v79
  %v225 = vpop.f32.mrf.mxu0
  %v226 = vadd.f32 0.0, %v225
  %v227 = vpop.f32.mrf.mxu0
  %228 = vmatprep.mubr.f32.mxu0 0.0
  %229 = vmatmul.mubr.f32.gmra.mxu0 %v82
  %v230 = vpop.f32.mrf.mxu0
  %v231 = vadd.f32 0.0, %v230
  %v232 = vpop.f32.mrf.mxu0
  %233 = vdwg.mxu0
  %234 = vst.msk [vmem:[%s2] sm:$0xff] %vm32, %v151
  %235 = vst.msk [vmem:[%s2 + $0x8] sm:$0xff] %vm32, %v156
  %236 = vst.msk [vmem:[%s2 + $0x10] sm:$0xff] %vm32, %v161
  %237 = vst.msk [vmem:[%s2 + $0x18] sm:$0xff] %vm32, %v166
  %238 = vst.msk [vmem:[%s2 + $0x20] sm:$0xff] %vm32, %v171
  %239 = vst.msk [vmem:[%s2 + $0x28] sm:$0xff] %vm32, %v176
  %240 = vst.msk [vmem:[%s2 + $0x30] sm:$0xff] %vm32, %v181
  %241 = vst.msk [vmem:[%s2 + $0x38] sm:$0xff] %vm32, %v186
  %242 = vst.msk [vmem:[%s2 + $0x40] sm:$0xff] %vm32, %v191
  %243 = vst.msk [vmem:[%s2 + $0x48] sm:$0xff] %vm32, %v196
  %244 = vst.msk [vmem:[%s2 + $0x50] sm:$0xff] %vm32, %v201
  %245 = vst.msk [vmem:[%s2 + $0x58] sm:$0xff] %vm32, %v206
  %246 = vst.msk [vmem:[%s2 + $0x60] sm:$0xff] %vm32, %v211
  %247 = vst.msk [vmem:[%s2 + $0x68] sm:$0xff] %vm32, %v216
  %248 = vst.msk [vmem:[%s2 + $0x70] sm:$0xff] %vm32, %v221
  %249 = vst.msk [vmem:[%s2 + $0x78] sm:$0xff] %vm32, %v226
  %vm250 = vcmask 254976
  %251 = vst.msk [vmem:[%s2 + $0x80] sm:$0x3] %vm250, %v231
  // Predicated region
  $region10: #{tpu_custom_call.1} parent=0 // pred_check
    _
  $region11: #{tpu_custom_call.1} parent=0 // pred_check_branch
    %253 = sbr.rel (0) target = $region13
  $region12: #{tpu_custom_call.1} parent=0 // pred_region
    _
  $region13: #{tpu_custom_call.1} parent=0 // pred_fallthru
    _
  // Predicated region
  $region14: #{tpu_custom_call.1} parent=0 // pred_check
    _
  $region15: #{tpu_custom_call.1} parent=0 // pred_check_branch
    %255 = sbr.rel (0) target = $region17
  $region16: #{tpu_custom_call.1} parent=0 // pred_region
    _
  $region17: #{tpu_custom_call.1} parent=0 // pred_fallthru
    _

</llo_original>
